<compile_context>
chip_gen: v5e
topology: v5e:2x2
jax: 0.10.0
libtpu: 0.0.40
codegen_flags: <defaults>
</compile_context>

<pallas_src>
import functools

import jax
import jax.numpy as jnp
from jax.experimental import pallas as pl
from jax.experimental.pallas import tpu as pltpu
import numpy as np


def _soft_hist_kernel(x_ref, o_ref, *, half_sigma, scaled_edges):
    """x_ref: (W, TM) block (rows on lanes); o_ref: (bins, TM).

    out[k, m] = 0.5 * sum_w [ tanh(c*edge_{k+1} - c*x[m,w])
                            - tanh(c*edge_k   - c*x[m,w]) ],  c = sigma/2
    which equals the original sigmoid-difference formulation exactly.
    """
    y = half_sigma * x_ref[...].astype(jnp.float32)        # (W, TM), VPU
    prev = jnp.tanh(scaled_edges[0] - y)                    # (W, TM), 1 EUP tanh
    rows = []
    for edge in scaled_edges[1:]:
        cur = jnp.tanh(edge - y)                            # (W, TM), 1 EUP tanh
        diff = cur - prev                                   # (W, TM), VPU
        rows.append(jnp.sum(diff, axis=0, keepdims=True))   # (1, TM) sublane reduce
        prev = cur
    # (bins, TM): lane-dense full-width store.
    o_ref[...] = 0.5 * jnp.concatenate(rows, axis=0)


def _round_up(a, b):
    return ((a + b - 1) // b) * b


@functools.partial(
    jax.jit, static_argnames=("bins", "minval", "maxval", "sigma", "tile_m"))
def soft_histogram_2d_h(x, *, bins, minval, maxval, sigma, tile_m=512):
    """x: (B, C, H, W) -> (B, C, H, bins) float32."""
    B, C, H, W = x.shape
    delta = float(maxval - minval) / float(bins)
    half_sigma = 0.5 * float(sigma)
    # edge_e = min + delta * e, e = 0..bins ; pre-scaled by sigma/2.
    scaled_edges = tuple(half_sigma * (float(minval) + delta * e)
                         for e in range(bins + 1))

    M = B * C * H

    # Tile selection: lane axis must be a multiple of 128; prefer large tiles
    # but keep the grid >= 2 when M allows it (v7x has 2 TensorCores).
    m128 = _round_up(M, 128)
    tm = _round_up(min(int(tile_m), m128), 128)
    if m128 // tm < 2 and m128 >= 2 * 128:
        tm = _round_up(pl.cdiv(m128, 2), 128)
    m_pad = _round_up(m128, tm)
    grid = m_pad // tm

    # (B,C,H,W) -> (M, W) -> (W, M_pad): rows on the 128-lane axis so the
    # EUP-bound tanh runs on fully dense vregs.
    xt = jnp.transpose(x.reshape(M, W).astype(jnp.float32))
    if m_pad != M:
        xt = jnp.pad(xt, ((0, 0), (0, m_pad - M)))

    kernel = functools.partial(_soft_hist_kernel,
                               half_sigma=half_sigma,
                               scaled_edges=scaled_edges)

    out_t = pl.pallas_call(
        kernel,
        out_shape=jax.ShapeDtypeStruct((bins, m_pad), jnp.float32),
        grid_spec=pltpu.PrefetchScalarGridSpec(
            num_scalar_prefetch=0,
            grid=(grid,),
            in_specs=[pl.BlockSpec((W, tm), lambda i: (0, i))],
            out_specs=pl.BlockSpec((bins, tm), lambda i: (0, i)),
        ),
        compiler_params=pltpu.CompilerParams(
            dimension_semantics=("parallel",),
            vmem_limit_bytes=32 * 1024 * 1024),
    )(xt)

    # (bins, M) -> (M, bins) -> (B, C, H, bins)
    return jnp.transpose(out_t[:, :M]).reshape(B, C, H, bins)


def soft_histogram_2d_h_ref(x, *, bins, minval, maxval, sigma):
    """Pure-JAX reference mirroring the PyTorch forward exactly."""
    delta = float(maxval - minval) / float(bins)
    centers = minval + delta * (jnp.arange(bins, dtype=jnp.float32) + 0.5)
    diff = centers[None, None, None, :, None] - x[:, :, :, None, :]
    half = delta / 2.0
    val = (jax.nn.sigmoid(sigma * (diff + half))
           - jax.nn.sigmoid(sigma * (diff - half)))
    return jnp.sum(val, axis=-1)


if __name__ == "__main__":
    B, C, H, W = 2, 4, 16, 16
    bins = 8
    minval, maxval = 0.0, 1.0
    sigma = 24.0

    key = jax.random.PRNGKey(0)
    x = jax.random.uniform(key, (B, C, H, W), dtype=jnp.float32,
                           minval=minval, maxval=maxval)

    out = soft_histogram_2d_h(x, bins=bins, minval=minval, maxval=maxval,
                              sigma=sigma)
    out = jax.block_until_ready(out)

    ref = jax.block_until_ready(
        soft_histogram_2d_h_ref(x, bins=bins, minval=minval, maxval=maxval,
                                sigma=sigma))

    assert out.shape == (B, C, H, bins), out.shape
    # tanh-based sigmoid + edge-sharing changes rounding order slightly.
    np.testing.assert_allclose(np.asarray(out), np.asarray(ref),
                               rtol=2e-5, atol=2e-5)
    print("KERNEL_OK")
</pallas_src>

<mosaic_0001>
module attributes {stable_mosaic.version = 11 : i64} {
  func.func @_soft_hist_kernel(%arg0: i32, %arg1: memref<16x128xf32, #tpu.memory_space<vmem>>, %arg2: memref<8x128xf32, #tpu.memory_space<vmem>>) attributes {dimension_semantics = [#tpu.dimension_semantics<parallel>], iteration_bounds = array<i64: 1>, scalar_prefetch = 0 : i64, scratch_operands = 0 : i64, tpu.core_type = #tpu.core_type<tc>, window_params = [{transform_indices = @transform_0, window_bounds = array<i64: 16, 128>}, {transform_indices = @transform_1, window_bounds = array<i64: 8, 128>}]} {
    %c0 = arith.constant 0 : index
    %c0_0 = arith.constant 0 : index
    %0 = vector.load %arg1[%c0, %c0_0] : memref<16x128xf32, #tpu.memory_space<vmem>>, vector<16x128xf32>
    %cst = arith.constant 1.200000e+01 : f32
    %1 = vector.broadcast %cst : f32 to vector<16x128xf32>
    %2 = arith.mulf %1, %0 : vector<16x128xf32>
    %cst_1 = arith.constant 0.000000e+00 : f32
    %3 = vector.broadcast %cst_1 : f32 to vector<16x128xf32>
    %4 = arith.subf %3, %2 : vector<16x128xf32>
    %5 = math.tanh %4 : vector<16x128xf32>
    %cst_2 = arith.constant 1.500000e+00 : f32
    %6 = vector.broadcast %cst_2 : f32 to vector<16x128xf32>
    %7 = arith.subf %6, %2 : vector<16x128xf32>
    %8 = math.tanh %7 : vector<16x128xf32>
    %9 = arith.subf %8, %5 : vector<16x128xf32>
    %cst_3 = arith.constant dense<0.000000e+00> : vector<128xf32>
    %10 = vector.multi_reduction <add>, %9, %cst_3 [0] : vector<16x128xf32> to vector<128xf32>
    %11 = vector.shape_cast %10 : vector<128xf32> to vector<1x128xf32>
    %cst_4 = arith.constant 3.000000e+00 : f32
    %12 = vector.broadcast %cst_4 : f32 to vector<16x128xf32>
    %13 = arith.subf %12, %2 : vector<16x128xf32>
    %14 = math.tanh %13 : vector<16x128xf32>
    %15 = arith.subf %14, %8 : vector<16x128xf32>
    %cst_5 = arith.constant dense<0.000000e+00> : vector<128xf32>
    %16 = vector.multi_reduction <add>, %15, %cst_5 [0] : vector<16x128xf32> to vector<128xf32>
    %17 = vector.shape_cast %16 : vector<128xf32> to vector<1x128xf32>
    %cst_6 = arith.constant 4.500000e+00 : f32
    %18 = vector.broadcast %cst_6 : f32 to vector<16x128xf32>
    %19 = arith.subf %18, %2 : vector<16x128xf32>
    %20 = math.tanh %19 : vector<16x128xf32>
    %21 = arith.subf %20, %14 : vector<16x128xf32>
    %cst_7 = arith.constant dense<0.000000e+00> : vector<128xf32>
    %22 = vector.multi_reduction <add>, %21, %cst_7 [0] : vector<16x128xf32> to vector<128xf32>
    %23 = vector.shape_cast %22 : vector<128xf32> to vector<1x128xf32>
    %cst_8 = arith.constant 6.000000e+00 : f32
    %24 = vector.broadcast %cst_8 : f32 to vector<16x128xf32>
    %25 = arith.subf %24, %2 : vector<16x128xf32>
    %26 = math.tanh %25 : vector<16x128xf32>
    %27 = arith.subf %26, %20 : vector<16x128xf32>
    %cst_9 = arith.constant dense<0.000000e+00> : vector<128xf32>
    %28 = vector.multi_reduction <add>, %27, %cst_9 [0] : vector<16x128xf32> to vector<128xf32>
    %29 = vector.shape_cast %28 : vector<128xf32> to vector<1x128xf32>
    %cst_10 = arith.constant 7.500000e+00 : f32
    %30 = vector.broadcast %cst_10 : f32 to vector<16x128xf32>
    %31 = arith.subf %30, %2 : vector<16x128xf32>
    %32 = math.tanh %31 : vector<16x128xf32>
    %33 = arith.subf %32, %26 : vector<16x128xf32>
    %cst_11 = arith.constant dense<0.000000e+00> : vector<128xf32>
    %34 = vector.multi_reduction <add>, %33, %cst_11 [0] : vector<16x128xf32> to vector<128xf32>
    %35 = vector.shape_cast %34 : vector<128xf32> to vector<1x128xf32>
    %cst_12 = arith.constant 9.000000e+00 : f32
    %36 = vector.broadcast %cst_12 : f32 to vector<16x128xf32>
    %37 = arith.subf %36, %2 : vector<16x128xf32>
    %38 = math.tanh %37 : vector<16x128xf32>
    %39 = arith.subf %38, %32 : vector<16x128xf32>
    %cst_13 = arith.constant dense<0.000000e+00> : vector<128xf32>
    %40 = vector.multi_reduction <add>, %39, %cst_13 [0] : vector<16x128xf32> to vector<128xf32>
    %41 = vector.shape_cast %40 : vector<128xf32> to vector<1x128xf32>
    %cst_14 = arith.constant 1.050000e+01 : f32
    %42 = vector.broadcast %cst_14 : f32 to vector<16x128xf32>
    %43 = arith.subf %42, %2 : vector<16x128xf32>
    %44 = math.tanh %43 : vector<16x128xf32>
    %45 = arith.subf %44, %38 : vector<16x128xf32>
    %cst_15 = arith.constant dense<0.000000e+00> : vector<128xf32>
    %46 = vector.multi_reduction <add>, %45, %cst_15 [0] : vector<16x128xf32> to vector<128xf32>
    %47 = vector.shape_cast %46 : vector<128xf32> to vector<1x128xf32>
    %cst_16 = arith.constant 1.200000e+01 : f32
    %48 = vector.broadcast %cst_16 : f32 to vector<16x128xf32>
    %49 = arith.subf %48, %2 : vector<16x128xf32>
    %50 = math.tanh %49 : vector<16x128xf32>
    %51 = arith.subf %50, %44 : vector<16x128xf32>
    %cst_17 = arith.constant dense<0.000000e+00> : vector<128xf32>
    %52 = vector.multi_reduction <add>, %51, %cst_17 [0] : vector<16x128xf32> to vector<128xf32>
    %53 = vector.shape_cast %52 : vector<128xf32> to vector<1x128xf32>
    %54 = tpu.concatenate %11, %17, %23, %29, %35, %41, %47, %53 in 0 : vector<1x128xf32>, vector<1x128xf32>, vector<1x128xf32>, vector<1x128xf32>, vector<1x128xf32>, vector<1x128xf32>, vector<1x128xf32>, vector<1x128xf32> -> vector<8x128xf32>
    %cst_18 = arith.constant 5.000000e-01 : f32
    %55 = vector.broadcast %cst_18 : f32 to vector<8x128xf32>
    %56 = arith.mulf %55, %54 : vector<8x128xf32>
    %c0_19 = arith.constant 0 : index
    %c0_20 = arith.constant 0 : index
    %57 = vector.load %arg2[%c0_19, %c0_20] : memref<8x128xf32, #tpu.memory_space<vmem>>, vector<8x128xf32>
    tpu.vector_store %arg2[%c0_19, %c0_20], %56 {strides = array<i32>} : memref<8x128xf32, #tpu.memory_space<vmem>>, vector<8x128xf32>,
    return
  }
  func.func @transform_0(%arg0: i32) -> (i32, i32) {
    %c0_i32 = arith.constant 0 : i32
    %c0_i32_0 = arith.constant 0 : i32
    return %c0_i32, %arg0 : i32, i32
  }
  func.func @transform_1(%arg0: i32) -> (i32, i32) {
    %c0_i32 = arith.constant 0 : i32
    %c0_i32_0 = arith.constant 0 : i32
    return %c0_i32, %arg0 : i32, i32
  }
}

</mosaic_0001>

<llo_original>
// kernel: soft_histogram_2d_h.1
$region0: #{soft_histogram_2d_h.1}
  #allocation0 [shape = 'u32[]', space=smem, size = 0x4, offset = 0x4, fixed_abs, tag = 'smem constant byte address 0x4 - core index']
  #allocation1 [shape = 'u32[72,128]{1,0:T(1,128)}', space=vmem, size = 0x9000, scoped, tag = 'internal scratch']
  %s0 = inlined_call_operand.vmem [shape: f32[16,128], index: 0, kind: input, shape index: {}]
  %s1 = inlined_call_operand.vmem [shape: f32[8,128], index: 1, kind: output, shape index: {}]
  %s2 = sld [smem:[#allocation0]]
  $region14: #{soft_histogram_2d_h.1} parent=0
    _
  %s4 = ssub.s32 1, %s2
  %s5 = scalar_select 0, %s4, %s2
  // Predicated region
  $region2: #{soft_histogram_2d_h.1} parent=0 // pred_check
    _
  $region3: #{soft_histogram_2d_h.1} parent=0 // pred_check_branch
    %7 = sbr.rel (0) target = $region5
  $region4: #{soft_histogram_2d_h.1} parent=0 // pred_region
    _
  $region5: #{soft_histogram_2d_h.1} parent=0 // pred_fallthru
    _
  %v8 = vld [vmem:[%s0] sm:$0xff]
  %v9 = vld [vmem:[%s0 + $0x8] sm:$0xff]
  %v10 = vmul.f32 %v8, 12.0
  %v11 = vmul.f32 %v9, 12.0
  %v12 = vsub.f32 0.0, %v10
  %v13 = vsub.f32 0.0, %v11
  %v14 = vtanh.pop %v12
  %v15 = vtanh.pop %v13
  %v16 = vsub.f32 1.5, %v10
  %v17 = vsub.f32 1.5, %v11
  %v18 = vtanh.pop %v16
  %v19 = vtanh.pop %v17
  %v20 = vsub.f32 %v18, %v14
  %v21 = vsub.f32 %v19, %v15
  %v22 = vadd.f32 %v20, %v21
  %v23 = vrot.slane %v22, 4
  %v24 = vadd.f32 %v22, %v23
  %v25 = vrot.slane %v24, 2
  %v26 = vadd.f32 %v24, %v25
  %v27 = vrot.slane %v26, 1
  %v28 = vadd.f32 %v26, %v27
  %v29 = vsub.f32 3.0, %v10
  %v30 = vsub.f32 3.0, %v11
  %v31 = vtanh.pop %v29
  %v32 = vtanh.pop %v30
  %v33 = vsub.f32 %v31, %v18
  %v34 = vsub.f32 %v32, %v19
  %v35 = vadd.f32 %v33, %v34
  %v36 = vrot.slane %v35, 4
  %v37 = vadd.f32 %v35, %v36
  %v38 = vrot.slane %v37, 2
  %v39 = vadd.f32 %v37, %v38
  %v40 = vrot.slane %v39, 1
  %v41 = vadd.f32 %v39, %v40
  %v42 = vsub.f32 4.5, %v10
  %v43 = vsub.f32 4.5, %v11
  %v44 = vtanh.pop %v42
  %v45 = vtanh.pop %v43
  %v46 = vsub.f32 %v44, %v31
  %v47 = vsub.f32 %v45, %v32
  %v48 = vadd.f32 %v46, %v47
  %v49 = vrot.slane %v48, 4
  %v50 = vadd.f32 %v48, %v49
  %v51 = vrot.slane %v50, 2
  %v52 = vadd.f32 %v50, %v51
  %v53 = vrot.slane %v52, 1
  %v54 = vadd.f32 %v52, %v53
  %v55 = vsub.f32 6.0, %v10
  %v56 = vsub.f32 6.0, %v11
  %v57 = vtanh.pop %v55
  %v58 = vtanh.pop %v56
  %v59 = vsub.f32 %v57, %v44
  %v60 = vsub.f32 %v58, %v45
  %v61 = vadd.f32 %v59, %v60
  %v62 = vrot.slane %v61, 4
  %v63 = vadd.f32 %v61, %v62
  %v64 = vrot.slane %v63, 2
  %v65 = vadd.f32 %v63, %v64
  %v66 = vrot.slane %v65, 1
  %v67 = vadd.f32 %v65, %v66
  %v68 = vsub.f32 7.5, %v10
  %v69 = vsub.f32 7.5, %v11
  %v70 = vtanh.pop %v68
  %v71 = vtanh.pop %v69
  %v72 = vsub.f32 %v70, %v57
  %v73 = vsub.f32 %v71, %v58
  %v74 = vadd.f32 %v72, %v73
  %v75 = vrot.slane %v74, 4
  %v76 = vadd.f32 %v74, %v75
  %v77 = vrot.slane %v76, 2
  %v78 = vadd.f32 %v76, %v77
  %v79 = vrot.slane %v78, 1
  %v80 = vadd.f32 %v78, %v79
  %v81 = vsub.f32 9.0, %v10
  %v82 = vsub.f32 9.0, %v11
  %v83 = vtanh.pop %v81
  %v84 = vtanh.pop %v82
  %v85 = vsub.f32 %v83, %v70
  %v86 = vsub.f32 %v84, %v71
  %v87 = vadd.f32 %v85, %v86
  %v88 = vrot.slane %v87, 4
  %v89 = vadd.f32 %v87, %v88
  %v90 = vrot.slane %v89, 2
  %v91 = vadd.f32 %v89, %v90
  %v92 = vrot.slane %v91, 1
  %v93 = vadd.f32 %v91, %v92
  %v94 = vsub.f32 10.5, %v10
  %v95 = vsub.f32 10.5, %v11
  %v96 = vtanh.pop %v94
  %v97 = vtanh.pop %v95
  %v98 = vsub.f32 %v96, %v83
  %v99 = vsub.f32 %v97, %v84
  %v100 = vadd.f32 %v98, %v99
  %v101 = vrot.slane %v100, 4
  %v102 = vadd.f32 %v100, %v101
  %v103 = vrot.slane %v102, 2
  %v104 = vadd.f32 %v102, %v103
  %v105 = vrot.slane %v104, 1
  %v106 = vadd.f32 %v104, %v105
  %v107 = vsub.f32 12.0, %v10
  %v108 = vsub.f32 12.0, %v11
  %v109 = vtanh.pop %v107
  %v110 = vtanh.pop %v108
  %v111 = vsub.f32 %v109, %v96
  %v112 = vsub.f32 %v110, %v97
  %v113 = vadd.f32 %v111, %v112
  %v114 = vrot.slane %v113, 4
  %v115 = vadd.f32 %v113, %v114
  %v116 = vrot.slane %v115, 2
  %v117 = vadd.f32 %v115, %v116
  %v118 = vrot.slane %v117, 1
  %v119 = vadd.f32 %v117, %v118
  %vm120 = vcmask 1040384
  %v121 = vsel %vm120, %v28, %v41
  %vm122 = vcmask 1041408
  %v123 = vsel %vm122, %v121, %v54
  %vm124 = vcmask 1042432
  %v125 = vsel %vm124, %v123, %v67
  %vm126 = vcmask 1043456
  %v127 = vsel %vm126, %v125, %v80
  %vm128 = vcmask 1044480
  %v129 = vsel %vm128, %v127, %v93
  %vm130 = vcmask 1045504
  %v131 = vsel %vm130, %v129, %v106
  %vm132 = vcmask 1046528
  %v133 = vsel %vm132, %v131, %v119
  %v134 = vmul.f32 %v133, 0.5
  %135 = vst [vmem:[%s1] sm:$0xff] %v134
  // Predicated region
  $region6: #{soft_histogram_2d_h.1} parent=0 // pred_check
    _
  $region7: #{soft_histogram_2d_h.1} parent=0 // pred_check_branch
    %137 = sbr.rel (0) target = $region9
  $region8: #{soft_histogram_2d_h.1} parent=0 // pred_region
    _
  $region9: #{soft_histogram_2d_h.1} parent=0 // pred_fallthru
    _
  // Predicated region
  $region10: #{soft_histogram_2d_h.1} parent=0 // pred_check
    _
  $region11: #{soft_histogram_2d_h.1} parent=0 // pred_check_branch
    %139 = sbr.rel (0) target = $region13
  $region12: #{soft_histogram_2d_h.1} parent=0 // pred_region
    _
  $region13: #{soft_histogram_2d_h.1} parent=0 // pred_fallthru
    _

</llo_original>
